<compile_context>
chip_gen: v7x
topology: tpu7x:2x2x1
jax: 0.10.0
libtpu: 0.0.40
codegen_flags: <defaults>
</compile_context>

<pallas_src>
import numpy as np
import jax
import jax.numpy as jnp
from jax.experimental import pallas as pl
from jax.experimental.pallas import tpu as pltpu


def _round_up(x, m):
    return ((x + m - 1) // m) * m


# --------------------------------------------------------------------------
# Stage 1: per-token projection.
#   x: (TM, H), w: (H, 2H) = [W_L^T | W_R^T], b: (1, H)
#   a = x @ W_L^T + b      (repeat side, indexed by i)
#   c = x @ W_R^T          (visible side, indexed by j)
# --------------------------------------------------------------------------
def _proj_kernel(x_ref, w_ref, b_ref, a_ref, c_ref):
    h = a_ref.shape[-1]
    acc = jnp.dot(x_ref[...], w_ref[...], preferred_element_type=jnp.float32)
    a_ref[...] = (acc[:, :h] + b_ref[...]).astype(a_ref.dtype)
    c_ref[...] = acc[:, h:].astype(c_ref.dtype)


# --------------------------------------------------------------------------
# Stage 2: fused pair gather + combine.
#   ii_ref / jj_ref : SMEM int32 (P,) scalar-prefetched pair index tables
#   a_ref / c_ref   : (S, H) VMEM-resident rows for the current batch element
#   o_ref           : (TP, H) output block of pair rows
# --------------------------------------------------------------------------
def _pair_tanh_kernel(ii_ref, jj_ref, a_ref, c_ref, o_ref):
    tp = o_ref.shape[0]
    p_total = ii_ref.shape[0]
    base = pl.program_id(1) * tp
    n_valid = jnp.minimum(tp, p_total - base)   # ragged last block

    def body(t, carry):
        p = base + t
        i = ii_ref[p]
        j = jj_ref[p]
        row = jnp.tanh(a_ref[pl.ds(i, 1), :] + c_ref[pl.ds(j, 1), :])
        o_ref[pl.ds(t, 1), :] = row.astype(o_ref.dtype)
        return carry

    jax.lax.fori_loop(0, n_valid, body, 0)


def handshaking_kernel_cat(seq_hiddens, w_t, b, *,
                           proj_tile=256, pair_tile=1024,
                           use_bf16_matmul=False):
    """Pallas implementation of HandshakingKernel.forward (shaking_type='cat').

    seq_hiddens: (B, S, H) float32
    w_t:         (2H, H)   float32  (transpose of the PyTorch Linear weight)
    b:           (H,)      float32
    returns:     (B, P, H) with P = S*(S+1)/2, pair order matching the torch loop.
    """
    B, S, H = seq_hiddens.shape
    dtype = seq_hiddens.dtype
    P = S * (S + 1) // 2

    # ---------------- stage 1: one small projection matmul (MXU) ------------
    # Build the (H, 2H) concatenated weight so that  x @ w_both = [A - b, C].
    w_both = jnp.concatenate([w_t[:H, :], w_t[H:, :]], axis=1)   # (H, 2H)
    b2 = b.reshape(1, H)

    Mp = B * S
    x = seq_hiddens.reshape(Mp, H)
    tile_m = min(proj_tile, _round_up(Mp, 8))
    grid_m = pl.cdiv(Mp, tile_m)

    if use_bf16_matmul:   # v6e / v7x production path; keeps f32 accumulation
        x_in, w_in = x.astype(jnp.bfloat16), w_both.astype(jnp.bfloat16)
    else:
        x_in, w_in = x, w_both

    a_flat, c_flat = pl.pallas_call(
        _proj_kernel,
        out_shape=(jax.ShapeDtypeStruct((Mp, H), dtype),
                   jax.ShapeDtypeStruct((Mp, H), dtype)),
        grid_spec=pltpu.PrefetchScalarGridSpec(
            num_scalar_prefetch=0,
            grid=(grid_m,),
            in_specs=[
                pl.BlockSpec((tile_m, H), lambda m: (m, 0)),
                pl.BlockSpec((H, 2 * H), lambda m: (0, 0)),   # resident weight
                pl.BlockSpec((1, H), lambda m: (0, 0)),       # resident bias
            ],
            out_specs=[
                pl.BlockSpec((tile_m, H), lambda m: (m, 0)),
                pl.BlockSpec((tile_m, H), lambda m: (m, 0)),
            ],
        ),
        compiler_params=pltpu.CompilerParams(
            dimension_semantics=("parallel",)),
    )(x_in, w_in, b2)

    A = a_flat.reshape(B, S, H)   # free reshape (leading-dim split)
    C = c_flat.reshape(B, S, H)

    # -------- pair index tables (upper triangle, same order as torch loop) --
    iu = np.triu_indices(S)
    ii = jnp.asarray(iu[0], dtype=jnp.int32)   # (P,)
    jj = jnp.asarray(iu[1], dtype=jnp.int32)   # (P,)

    # ------------- stage 2: fused gather + tanh(A[i] + C[j]) ----------------
    tp = min(pair_tile, _round_up(P, 8))
    grid_p = pl.cdiv(P, tp)

    out = pl.pallas_call(
        _pair_tanh_kernel,
        out_shape=jax.ShapeDtypeStruct((B, P, H), dtype),
        grid_spec=pltpu.PrefetchScalarGridSpec(
            num_scalar_prefetch=2,
            grid=(B, grid_p),
            in_specs=[
                pl.BlockSpec((None, S, H), lambda bb, pb, ii, jj: (bb, 0, 0)),
                pl.BlockSpec((None, S, H), lambda bb, pb, ii, jj: (bb, 0, 0)),
            ],
            out_specs=pl.BlockSpec((None, tp, H),
                                   lambda bb, pb, ii, jj: (bb, pb, 0)),
        ),
        compiler_params=pltpu.CompilerParams(
            dimension_semantics=("parallel", "parallel")),
    )(ii, jj, A, C)

    return out


def handshaking_reference(seq_hiddens, w_t, b):
    """Pure-JAX reference reproducing the PyTorch forward (shaking_type='cat')."""
    B, S, H = seq_hiddens.shape
    chunks = []
    for ind in range(S):
        hidden_each_step = seq_hiddens[:, ind, :]                 # (B, H)
        visible = seq_hiddens[:, ind:, :]                         # (B, S-ind, H)
        repeat = jnp.broadcast_to(hidden_each_step[:, None, :],
                                  (B, S - ind, H))
        cat = jnp.concatenate([repeat, visible], axis=-1)         # (B, S-ind, 2H)
        chunks.append(jnp.tanh(cat @ w_t + b))
    return jnp.concatenate(chunks, axis=1)


if __name__ == "__main__":
    B, S, H = 2, 8, 32
    key = jax.random.PRNGKey(0)
    k_x, k_w, k_b = jax.random.split(key, 3)

    seq_hiddens = jax.random.normal(k_x, (B, S, H), dtype=jnp.float32)

    # combine_fc: nn.Linear(2H, H) -> weight (H, 2H), bias (H,)
    bound = 1.0 / jnp.sqrt(2.0 * H)
    w = jax.random.uniform(k_w, (H, 2 * H), jnp.float32, -bound, bound)
    b = jax.random.uniform(k_b, (H,), jnp.float32, -bound, bound)
    w_t = w.T  # (2H, H)

    out = handshaking_kernel_cat(seq_hiddens, w_t, b)
    out = jax.block_until_ready(out)

    ref = handshaking_reference(seq_hiddens, w_t, b)
    assert out.shape == (B, S * (S + 1) // 2, H), out.shape
    assert jnp.allclose(out, ref, atol=1e-4, rtol=1e-4), \
        float(jnp.max(jnp.abs(out - ref)))

    print("KERNEL_OK")
</pallas_src>

<mosaic_0001>
module attributes {stable_mosaic.version = 11 : i64} {
  func.func @_proj_kernel(%arg0: i32, %arg1: memref<16x32xf32, #tpu.memory_space<vmem>>, %arg2: memref<32x64xf32, #tpu.memory_space<vmem>>, %arg3: memref<1x32xf32, #tpu.memory_space<vmem>>, %arg4: memref<16x32xf32, #tpu.memory_space<vmem>>, %arg5: memref<16x32xf32, #tpu.memory_space<vmem>>) attributes {dimension_semantics = [#tpu.dimension_semantics<parallel>], iteration_bounds = array<i64: 1>, scalar_prefetch = 0 : i64, scratch_operands = 0 : i64, tpu.core_type = #tpu.core_type<tc>, window_params = [{transform_indices = @transform_0, window_bounds = array<i64: 16, 32>}, {pipeline_mode = #tpu.pipeline_mode<synchronous>, transform_indices = @transform_1, window_bounds = array<i64: 32, 64>}, {pipeline_mode = #tpu.pipeline_mode<synchronous>, transform_indices = @transform_2, window_bounds = array<i64: 1, 32>}, {transform_indices = @transform_3, window_bounds = array<i64: 16, 32>}, {transform_indices = @transform_4, window_bounds = array<i64: 16, 32>}]} {
    %c0 = arith.constant 0 : index
    %c0_0 = arith.constant 0 : index
    %0 = vector.load %arg1[%c0, %c0_0] : memref<16x32xf32, #tpu.memory_space<vmem>>, vector<16x32xf32>
    %c0_1 = arith.constant 0 : index
    %c0_2 = arith.constant 0 : index
    %1 = vector.load %arg2[%c0_1, %c0_2] : memref<32x64xf32, #tpu.memory_space<vmem>>, vector<32x64xf32>
    %cst = arith.constant dense<0.000000e+00> : vector<16x64xf32>
    %2 = tpu.matmul %0, %1, %cst {dimension_numbers = #tpu.dot_dimension_numbers<[1], [0], [0], [1], [0, 0, 1, 1], [], []>} : vector<16x32xf32>, vector<32x64xf32>, vector<16x64xf32> -> vector<16x64xf32>
    %3 = vector.extract_strided_slice %2 {offsets = [0, 0], sizes = [16, 32], strides = [1, 1]} : vector<16x64xf32> to vector<16x32xf32>
    %c0_3 = arith.constant 0 : index
    %c0_4 = arith.constant 0 : index
    %4 = vector.load %arg3[%c0_3, %c0_4] : memref<1x32xf32, #tpu.memory_space<vmem>>, vector<1x32xf32>
    %5 = vector.broadcast %4 : vector<1x32xf32> to vector<16x32xf32>
    %6 = arith.addf %3, %5 : vector<16x32xf32>
    %c0_5 = arith.constant 0 : index
    %c0_6 = arith.constant 0 : index
    %7 = vector.load %arg4[%c0_5, %c0_6] : memref<16x32xf32, #tpu.memory_space<vmem>>, vector<16x32xf32>
    tpu.vector_store %arg4[%c0_5, %c0_6], %6 {strides = array<i32>} : memref<16x32xf32, #tpu.memory_space<vmem>>, vector<16x32xf32>,
    %8 = vector.extract_strided_slice %2 {offsets = [0, 32], sizes = [16, 32], strides = [1, 1]} : vector<16x64xf32> to vector<16x32xf32>
    %c0_7 = arith.constant 0 : index
    %c0_8 = arith.constant 0 : index
    %9 = vector.load %arg5[%c0_7, %c0_8] : memref<16x32xf32, #tpu.memory_space<vmem>>, vector<16x32xf32>
    tpu.vector_store %arg5[%c0_7, %c0_8], %8 {strides = array<i32>} : memref<16x32xf32, #tpu.memory_space<vmem>>, vector<16x32xf32>,
    return
  }
  func.func @transform_0(%arg0: i32) -> (i32, i32) {
    %c0_i32 = arith.constant 0 : i32
    %c0_i32_0 = arith.constant 0 : i32
    return %arg0, %c0_i32 : i32, i32
  }
  func.func @transform_1(%arg0: i32) -> (i32, i32) {
    %c0_i32 = arith.constant 0 : i32
    %c0_i32_0 = arith.constant 0 : i32
    %c0_i32_1 = arith.constant 0 : i32
    return %c0_i32, %c0_i32_0 : i32, i32
  }
  func.func @transform_2(%arg0: i32) -> (i32, i32) {
    %c0_i32 = arith.constant 0 : i32
    %c0_i32_0 = arith.constant 0 : i32
    %c0_i32_1 = arith.constant 0 : i32
    return %c0_i32, %c0_i32_0 : i32, i32
  }
  func.func @transform_3(%arg0: i32) -> (i32, i32) {
    %c0_i32 = arith.constant 0 : i32
    %c0_i32_0 = arith.constant 0 : i32
    return %arg0, %c0_i32 : i32, i32
  }
  func.func @transform_4(%arg0: i32) -> (i32, i32) {
    %c0_i32 = arith.constant 0 : i32
    %c0_i32_0 = arith.constant 0 : i32
    return %arg0, %c0_i32 : i32, i32
  }
}

</mosaic_0001>

<llo_original>
// kernel: tpu_custom_call.1
$region0: #{tpu_custom_call.1}
  #allocation0 [shape = 'u32[]', space=smem, size = 0x4, offset = 0x4, fixed_abs, tag = 'smem constant byte address 0x4 - core index']
  #allocation1 [shape = 'u32[144,128]{1,0:T(1,128)}', space=vmem, size = 0x12000, scoped, tag = 'internal scratch']
  %s0 = inlined_call_operand.hbm [shape: f32[16,32], index: 0, kind: input, shape index: {}]
  %s1 = inlined_call_operand.hbm [shape: f32[32,64], index: 1, kind: input, shape index: {}]
  %s2 = inlined_call_operand.vmem [shape: f32[1,32], index: 2, kind: input, shape index: {}]
  %s3 = inlined_call_operand.hbm [shape: f32[16,32], index: 3, kind: output, shape index: {0}]
  %s4 = inlined_call_operand.hbm [shape: f32[16,32], index: 4, kind: output, shape index: {1}]
  %5 = xla_tuple %s3, %s4
  %s6 = sld [smem:[#allocation0]]
  $region38: #{tpu_custom_call.1} parent=0
    _
  %s8 = ssub.s32 1, %s6
  %s9 = scalar_select 0, %s8, %s6
  $region1: #{tpu_custom_call.1} parent=0
    #allocation2 [shape = 'u8[8192]{0}', space=vmem, size = 0x2000, scoped, tag = 'input window, operand 0, single buffered']
    #allocation3 [shape = 's32[1]{0}', space=sflag, size = 0x4, scoped, tag = 'scoped memory for tpu_custom_call.1']
    #allocation4 [shape = 's32[1]{0}', space=sflag, size = 0x4, scoped, tag = 'scoped memory for tpu_custom_call.1']
    #allocation5 [shape = 'u8[16384]{0}', space=vmem, size = 0x4000, scoped, tag = 'input window, operand 1, single buffered']
    #allocation6 [shape = 's32[1]{0}', space=sflag, size = 0x4, scoped, tag = 'scoped memory for tpu_custom_call.1']
    #allocation7 [shape = 'u8[8192]{0}', space=vmem, size = 0x2000, scoped, tag = 'output window, operand 0, single buffered']
    #allocation8 [shape = 'u8[8192]{0}', space=vmem, size = 0x2000, scoped, tag = 'output window, operand 1, single buffered']
    #allocation9 [shape = 's32[1]{0}', space=sflag, size = 0x4, scoped, tag = 'scoped memory for tpu_custom_call.1']
    %10 = vsyncpa [#allocation3], 0
    %11 = vsyncpa [#allocation6], 0
    %12 = vsyncpa [#allocation4], 0
    %13 = vsyncpa [#allocation9], 0
    // Predicated region
    $region2: #{tpu_custom_call.1} parent=1 // pred_check
      _
    $region3: #{tpu_custom_call.1} parent=1 // pred_check_branch
      %15 = sbr.rel (0) target = $region5
    $region4: #{tpu_custom_call.1} parent=1 // pred_region
      %s17 = ssub.s32 256, 256
      %18 = vsyncadd [#allocation3], %s17
      %s19 = sshll.u32 [#allocation2], 4
      %s20 = int_to_ptr.vmem [resolvable:$true] %s19
      %25 = dma.hbm_to_vmem [thread:$0]  %s0, 256, %s20, [#allocation3], 128, 128, 8
    $region5: #{tpu_custom_call.1} parent=1 // pred_fallthru
      _
    // Predicated region
    $region6: #{tpu_custom_call.1} parent=1 // pred_check
      _
    $region7: #{tpu_custom_call.1} parent=1 // pred_check_branch
      %27 = sbr.rel (0) target = $region9
    $region8: #{tpu_custom_call.1} parent=1 // pred_region
      %s29 = ssub.s32 512, 512
      %30 = vsyncadd [#allocation6], %s29
      %s31 = sshll.u32 [#allocation5], 4
      %s32 = int_to_ptr.vmem [resolvable:$true] %s31
      %37 = dma.hbm_to_vmem [thread:$0]  %s1, 512, %s32, [#allocation6], 128, 128, 8
    $region9: #{tpu_custom_call.1} parent=1 // pred_fallthru
      _
    // Predicated region
    $region10: #{tpu_custom_call.1} parent=1 // pred_check
      _
    $region11: #{tpu_custom_call.1} parent=1 // pred_check_branch
      %39 = sbr.rel (0) target = $region13
    $region12: #{tpu_custom_call.1} parent=1 // pred_region
      _
    $region13: #{tpu_custom_call.1} parent=1 // pred_fallthru
      _
    // Predicated region
    $region14: #{tpu_custom_call.1} parent=1 // pred_check
      _
    $region15: #{tpu_custom_call.1} parent=1 // pred_check_branch
      %41 = sbr.rel (0) target = $region17
    $region16: #{tpu_custom_call.1} parent=1 // pred_region
      %42 = dma.done [#allocation3], 256
    $region17: #{tpu_custom_call.1} parent=1 // pred_fallthru
      _
    // Predicated region
    $region18: #{tpu_custom_call.1} parent=1 // pred_check
      _
    $region19: #{tpu_custom_call.1} parent=1 // pred_check_branch
      %44 = sbr.rel (0) target = $region21
    $region20: #{tpu_custom_call.1} parent=1 // pred_region
      %45 = dma.done [#allocation6], 512
    $region21: #{tpu_custom_call.1} parent=1 // pred_fallthru
      _
    %v46 = vld [vmem:[#allocation2] sm:$0xff]
    %v47 = vld [vmem:[#allocation2 + $0x8] sm:$0xff]
    %v48 = vld [vmem:[#allocation5] sm:$0xff]
    %v49 = vld [vmem:[#allocation5 + $0x8] sm:$0xff]
    %v50 = vld [vmem:[#allocation5 + $0x10] sm:$0xff]
    %v51 = vld [vmem:[#allocation5 + $0x18] sm:$0xff]
    %vm52 = vcmask 261120
    %v54 = vsel %vm52, %v46, 0
    %v57 = vsel %vm52, %v47, 0
    %59 = vmatprep.subr.mxu0 0.0
    %60 = vmatpush1.msra.mxu0 %v48
    %61 = vmatprep.subr.mxu0 0.0
    %62 = vmatpush1.msra.mxu0 %v49
    %63 = vmatprep.subr.mxu0 0.0
    %64 = vmatpush1.msra.mxu0 %v50
    %65 = vmatprep.subr.mxu0 0.0
    %66 = vmatpush1.msra.mxu0 %v51
    %67 = vmatprep.subr.mxu0 0.0
    %68 = vmatpush1.msra.mxu0 0.0
    %69 = vmatprep.subr.mxu0 0.0
    %70 = vmatpush1.msra.mxu0 0.0
    %71 = vmatprep.subr.mxu0 0.0
    %72 = vmatpush1.msra.mxu0 0.0
    %73 = vmatprep.subr.mxu0 0.0
    %74 = vmatpush1.msra.mxu0 0.0
    %75 = vmatprep.subr.mxu0 0.0
    %76 = vmatpush1.msra.mxu0 0.0
    %77 = vmatprep.subr.mxu0 0.0
    %78 = vmatpush1.msra.mxu0 0.0
    %79 = vmatprep.subr.mxu0 0.0
    %80 = vmatpush1.msra.mxu0 0.0
    %81 = vmatprep.subr.mxu0 0.0
    %82 = vmatpush1.msra.mxu0 0.0
    %83 = vmatprep.subr.mxu0 0.0
    %84 = vmatpush1.msra.mxu0 0.0
    %85 = vmatprep.subr.mxu0 0.0
    %86 = vmatpush1.msra.mxu0 0.0
    %87 = vmatprep.subr.mxu0 0.0
    %88 = vmatpush1.msra.mxu0 0.0
    %89 = vmatprep.subr.mxu0 0.0
    %90 = vmatpush1.msra.mxu0 0.0
    %91 = vmatprep.subr.mxu0 0.0
    %92 = vmatpush1.msra.mxu0 0.0
    %93 = vmatprep.subr.mxu0 0.0
    %94 = vmatpush1.msra.mxu0 0.0
    %95 = vmatprep.subr.mxu0 0.0
    %96 = vmatpush1.msra.mxu0 0.0
    %97 = vmatprep.subr.mxu0 0.0
    %98 = vmatpush1.msra.mxu0 0.0
    %99 = vmatprep.subr.mxu0 0.0
    %100 = vmatpush1.msra.mxu0 0.0
    %101 = vmatprep.subr.mxu0 0.0
    %102 = vmatpush1.msra.mxu0 0.0
    %103 = vmatprep.subr.mxu0 0.0
    %104 = vmatpush1.msra.mxu0 0.0
    %105 = vmatprep.subr.mxu0 0.0
    %106 = vmatpush1.msra.mxu0 0.0
    %107 = vmatprep.subr.mxu0 0.0
    %108 = vmatpush1.msra.mxu0 0.0
    %109 = vmatprep.subr.mxu0 0.0
    %110 = vmatpush1.msra.mxu0 0.0
    %111 = vmatprep.subr.mxu0 0.0
    %112 = vmatpush1.msra.mxu0 0.0
    %113 = vmatprep.subr.mxu0 0.0
    %114 = vmatpush1.msra.mxu0 0.0
    %115 = vmatprep.subr.mxu0 0.0
    %116 = vmatpush1.msra.mxu0 0.0
    %117 = vmatprep.subr.mxu0 0.0
    %118 = vmatpush1.msra.mxu0 0.0
    %119 = vmatprep.subr.mxu0 0.0
    %120 = vmatpush1.msra.mxu0 0.0
    %121 = vmatprep.subr.mxu0 0.0
    %122 = vmatpush1.msra.mxu0 0.0
    %123 = vmatprep.mubr.f32.mxu0 0.0
    %124 = vmatmul.mubr.f32.gmra.mrb[0].mxu0 %v54
    %v125 = vpop.f32.mrb[0].mxu0
    %v126 = vadd.f32 0.0, %v125
    %v127 = vpop.f32.mrb[0].mxu0
    %128 = vmatprep.mubr.f32.mxu0 0.0
    %129 = vmatmul.mubr.f32.gmra.mrb[0].mxu0 %v57
    %v130 = vpop.f32.mrb[0].mxu0
    %v131 = vadd.f32 0.0, %v130
    %v132 = vpop.f32.mrb[0].mxu0
    %133 = vdwg.mxu0
    %v134 = vld [vmem:[%s2] sm:$0x1]
    %v136 = vlaneseq
    %v137 = vshrl.u32 %v136, 7
    %v138 = vsub.s32 0, %v137
    %v139 = vrot.slane %v134, %v138
    %v141 = vadd.f32 %v126, %v139
    %v142 = vadd.f32 %v131, %v139
    %143 = vst.msk [vmem:[#allocation7] sm:$0xff] %vm52, %v141
    %144 = vst.msk [vmem:[#allocation7 + $0x8] sm:$0xff] %vm52, %v142
    %147 = vrot.lane.b32.xlu0 %v126, 96
    %v148 = vpop.permute.xlu0 %147
    %149 = vrot.lane.b32.xlu0 %v131, 96
    %v150 = vpop.permute.xlu0 %149
    %153 = vst.msk [vmem:[#allocation8] sm:$0xff] %vm52, %v148
    %154 = vst.msk [vmem:[#allocation8 + $0x8] sm:$0xff] %vm52, %v150
    // Predicated region
    $region22: #{tpu_custom_call.1} parent=1 // pred_check
      _
    $region23: #{tpu_custom_call.1} parent=1 // pred_check_branch
      %156 = sbr.rel (0) target = $region25
    $region24: #{tpu_custom_call.1} parent=1 // pred_region
      %s158 = ssub.s32 256, 256
      %159 = vsyncadd [#allocation4], %s158
      %s160 = sshll.u32 [#allocation7], 4
      %s161 = int_to_ptr.vmem [resolvable:$true] %s160
      %166 = dma.vmem_to_hbm [thread:$0]  %s161, 256, %s3, [#allocation4], 128, 128, 8
    $region25: #{tpu_custom_call.1} parent=1 // pred_fallthru
      _
    // Predicated region
    $region26: #{tpu_custom_call.1} parent=1 // pred_check
      _
    $region27: #{tpu_custom_call.1} parent=1 // pred_check_branch
      %168 = sbr.rel (0) target = $region29
    $region28: #{tpu_custom_call.1} parent=1 // pred_region
      %s170 = ssub.s32 256, 256
      %171 = vsyncadd [#allocation9], %s170
      %s172 = sshll.u32 [#allocation8], 4
      %s173 = int_to_ptr.vmem [resolvable:$true] %s172
      %178 = dma.vmem_to_hbm [thread:$0]  %s173, 256, %s4, [#allocation9], 128, 128, 8
    $region29: #{tpu_custom_call.1} parent=1 // pred_fallthru
      _
    // Predicated region
    $region30: #{tpu_custom_call.1} parent=1 // pred_check
      _
    $region31: #{tpu_custom_call.1} parent=1 // pred_check_branch
      %180 = sbr.rel (0) target = $region33
    $region32: #{tpu_custom_call.1} parent=1 // pred_region
      %181 = dma.done [#allocation4], 256
    $region33: #{tpu_custom_call.1} parent=1 // pred_fallthru
      _
    // Predicated region
    $region34: #{tpu_custom_call.1} parent=1 // pred_check
      _
    $region35: #{tpu_custom_call.1} parent=1 // pred_check_branch
      %183 = sbr.rel (0) target = $region37
    $region36: #{tpu_custom_call.1} parent=1 // pred_region
      %184 = dma.done [#allocation9], 256
    $region37: #{tpu_custom_call.1} parent=1 // pred_fallthru
      _
    %185 = vsyncpa [#allocation3], 1
    %186 = vsyncpa [#allocation6], 1
    %187 = vsyncpa [#allocation4], 1
    %188 = vsyncpa [#allocation9], 1

</llo_original>
